<compile_context>
chip_gen: v5e
topology: v5e:2x2
jax: 0.10.0
libtpu: 0.0.40
codegen_flags: <defaults>
</compile_context>

<pallas_src>
import jax
import jax.numpy as jnp
from jax.experimental import pallas as pl
from jax.experimental.pallas import tpu as pltpu


def _round_up(v: int, m: int) -> int:
    return ((v + m - 1) // m) * m


def _swa_kernel(theta_ref, x_ref, o_ref):
    # theta_ref: (1, C, 1)   x_ref: (tile_b, C, tile_f)   o_ref: (tile_b, tile_f)
    x = x_ref[...].astype(jnp.float32)
    w = theta_ref[...].astype(jnp.float32)          # broadcasts over batch & lanes
    # Weighted average over the (small) channel axis: VPU multiply + XLU
    # sublane reduction — keeps the MXU free and the output lane-dense.
    o_ref[...] = jnp.sum(x * w, axis=1).astype(o_ref.dtype)


def softmax_weighted_averaging(x, theta, *, tile_b: int = 256, tile_f: int = 512):
    """out[b, f] = sum_c theta[c] * x[b, c, f].   x: (B, C, F) -> (B, F)."""
    B, C, F = x.shape
    theta3 = jnp.asarray(theta, jnp.float32).reshape(1, C, 1)

    # Batch on sublanes (multiple of 8), features on lanes (multiple of 128);
    # shrink tiles to the (padded) array when it is smaller than the default.
    tile_b = min(tile_b, _round_up(B, 8))
    tile_f = min(tile_f, _round_up(F, 128))
    Bp = _round_up(B, tile_b)
    Fp = _round_up(F, tile_f)

    if (Bp, Fp) != (B, F):
        x = jnp.pad(x, ((0, Bp - B), (0, 0), (0, Fp - F)))

    grid = (Bp // tile_b, Fp // tile_f)

    # VMEM budget: double-buffered x + out tiles (+ tiny theta), with margin.
    c_pad = _round_up(C, 8)
    x_tile_bytes = tile_b * c_pad * tile_f * 4
    o_tile_bytes = tile_b * tile_f * 4
    vmem_limit = min(64 << 20, max(16 << 20, 4 * (x_tile_bytes + o_tile_bytes)))

    cost = pl.CostEstimate(
        flops=2 * B * C * F,
        transcendentals=0,
        bytes_accessed=4 * (B * C * F + B * F + C),
    )

    out = pl.pallas_call(
        _swa_kernel,
        out_shape=jax.ShapeDtypeStruct((Bp, Fp), jnp.float32),
        grid=grid,
        in_specs=[
            pl.BlockSpec((1, C, 1), lambda i, j: (0, 0, 0)),            # theta
            pl.BlockSpec((tile_b, C, tile_f), lambda i, j: (i, 0, j)),  # x tile
        ],
        out_specs=pl.BlockSpec((tile_b, tile_f), lambda i, j: (i, j)),
        compiler_params=pltpu.CompilerParams(
            dimension_semantics=("parallel", "parallel"),
            vmem_limit_bytes=vmem_limit,
        ),
        cost_estimate=cost,
    )(theta3, x)

    return out[:B, :F]


def update_theta(theta, losses, *, moving=False, avg=False,
                 keep_rate=0.95, eta=-25.0):
    # TODO(synk): update_theta is a host-side parameter update (softmax of
    # scaled losses), not part of the forward pass — plain JAX, no kernel.
    if avg:
        return theta
    new_theta = jax.nn.softmax(jnp.asarray(losses, jnp.float32) * eta).reshape(1, 1, -1)
    if moving:
        return keep_rate * theta + (1.0 - keep_rate) * new_theta
    return new_theta


def _reference_forward(x, theta):
    # torch.squeeze(torch.matmul(theta, x), dim=1) with theta (1, 1, C)
    theta = jnp.asarray(theta, jnp.float32).reshape(1, 1, -1)
    return jnp.squeeze(jnp.matmul(theta, x), axis=1)


if __name__ == "__main__":
    n_channel = 4
    batch = 6
    feat = 200    # exercises the wrapper padding path (tiles padded to 8 x 256)

    key = jax.random.PRNGKey(0)
    x = jax.random.normal(key, (batch, n_channel, feat), jnp.float32)
    theta = jnp.full((1, 1, n_channel), 1.0 / n_channel, jnp.float32)

    out = softmax_weighted_averaging(x, theta)
    out = jax.block_until_ready(out)

    ref = _reference_forward(x, theta)
    assert out.shape == (batch, feat), out.shape
    assert jnp.allclose(out, ref, atol=1e-5, rtol=1e-5)

    print("KERNEL_OK")
</pallas_src>

<mosaic_0001>
module attributes {stable_mosaic.version = 11 : i64} {
  func.func @_swa_kernel(%arg0: i32, %arg1: i32, %arg2: memref<1x4x1xf32, #tpu.memory_space<vmem>>, %arg3: memref<8x4x256xf32, #tpu.memory_space<vmem>>, %arg4: memref<8x256xf32, #tpu.memory_space<vmem>>) attributes {dimension_semantics = [#tpu.dimension_semantics<parallel>, #tpu.dimension_semantics<parallel>], iteration_bounds = array<i64: 1, 1>, scalar_prefetch = 0 : i64, scratch_operands = 0 : i64, tpu.core_type = #tpu.core_type<tc>, window_params = [{pipeline_mode = #tpu.pipeline_mode<synchronous>, transform_indices = @transform_0, window_bounds = array<i64: 1, 4, 1>}, {transform_indices = @transform_1, window_bounds = array<i64: 8, 4, 256>}, {transform_indices = @transform_2, window_bounds = array<i64: 8, 256>}]} {
    %c0 = arith.constant 0 : index
    %c0_0 = arith.constant 0 : index
    %c0_1 = arith.constant 0 : index
    %0 = vector.load %arg3[%c0, %c0_0, %c0_1] : memref<8x4x256xf32, #tpu.memory_space<vmem>>, vector<8x4x256xf32>
    %c0_2 = arith.constant 0 : index
    %c0_3 = arith.constant 0 : index
    %c0_4 = arith.constant 0 : index
    %1 = vector.load %arg2[%c0_2, %c0_3, %c0_4] : memref<1x4x1xf32, #tpu.memory_space<vmem>>, vector<1x4x1xf32>
    %2 = vector.broadcast %1 : vector<1x4x1xf32> to vector<8x4x256xf32>
    %3 = arith.mulf %0, %2 : vector<8x4x256xf32>
    %cst = arith.constant dense<0.000000e+00> : vector<8x256xf32>
    %4 = vector.multi_reduction <add>, %3, %cst [1] : vector<8x4x256xf32> to vector<8x256xf32>
    %c0_5 = arith.constant 0 : index
    %c0_6 = arith.constant 0 : index
    %5 = vector.load %arg4[%c0_5, %c0_6] : memref<8x256xf32, #tpu.memory_space<vmem>>, vector<8x256xf32>
    tpu.vector_store %arg4[%c0_5, %c0_6], %4 {strides = array<i32>} : memref<8x256xf32, #tpu.memory_space<vmem>>, vector<8x256xf32>,
    return
  }
  func.func @transform_0(%arg0: i32, %arg1: i32) -> (i32, i32, i32) {
    %c0_i32 = arith.constant 0 : i32
    %c0_i32_0 = arith.constant 0 : i32
    %c0_i32_1 = arith.constant 0 : i32
    %c0_i32_2 = arith.constant 0 : i32
    return %c0_i32, %c0_i32_0, %c0_i32_1 : i32, i32, i32
  }
  func.func @transform_1(%arg0: i32, %arg1: i32) -> (i32, i32, i32) {
    %c0_i32 = arith.constant 0 : i32
    %c0_i32_0 = arith.constant 0 : i32
    return %arg0, %c0_i32, %arg1 : i32, i32, i32
  }
  func.func @transform_2(%arg0: i32, %arg1: i32) -> (i32, i32) {
    %c0_i32 = arith.constant 0 : i32
    return %arg0, %arg1 : i32, i32
  }
}

</mosaic_0001>

<llo_original>
// kernel: tpu_custom_call.1
$region0: #{tpu_custom_call.1}
  #allocation0 [shape = 'u32[]', space=smem, size = 0x4, offset = 0x4, fixed_abs, tag = 'smem constant byte address 0x4 - core index']
  #allocation1 [shape = 'u32[72,128]{1,0:T(1,128)}', space=vmem, size = 0x9000, scoped, tag = 'internal scratch']
  %s0 = inlined_call_operand.vmem [shape: f32[1,4,1], index: 0, kind: input, shape index: {}]
  %s1 = inlined_call_operand.hbm [shape: f32[8,4,256], index: 1, kind: input, shape index: {}]
  %s2 = inlined_call_operand.hbm [shape: f32[8,256], index: 2, kind: output, shape index: {}]
  %s3 = sld [smem:[#allocation0]]
  $region22: #{tpu_custom_call.1} parent=0
    _
  %s5 = ssub.s32 1, %s3
  %s6 = scalar_select 0, %s5, %s3
  $region1: #{tpu_custom_call.1} parent=0
    #allocation2 [shape = 'u8[32768]{0}', space=vmem, size = 0x8000, scoped, tag = 'input window, operand 1, single buffered']
    #allocation3 [shape = 's32[1]{0}', space=sflag, size = 0x4, scoped, tag = 'scoped memory for tpu_custom_call.1']
    #allocation4 [shape = 's32[1]{0}', space=sflag, size = 0x4, scoped, tag = 'scoped memory for tpu_custom_call.1']
    #allocation5 [shape = 'u8[8192]{0}', space=vmem, size = 0x2000, scoped, tag = 'output window, operand 0, single buffered']
    %7 = vsyncpa [#allocation3], 0
    %8 = vsyncpa [#allocation4], 0
    // Predicated region
    $region2: #{tpu_custom_call.1} parent=1 // pred_check
      _
    $region3: #{tpu_custom_call.1} parent=1 // pred_check_branch
      %10 = sbr.rel (0) target = $region5
    $region4: #{tpu_custom_call.1} parent=1 // pred_region
      _
    $region5: #{tpu_custom_call.1} parent=1 // pred_fallthru
      _
    // Predicated region
    $region6: #{tpu_custom_call.1} parent=1 // pred_check
      _
    $region7: #{tpu_custom_call.1} parent=1 // pred_check_branch
      %12 = sbr.rel (0) target = $region9
    $region8: #{tpu_custom_call.1} parent=1 // pred_region
      %14 = vsyncadd [#allocation3], 0
      %s15 = sshll.u32 %s1, 4
      %s16 = int_to_ptr.hbm [resolvable:$true] %s15
      %s17 = sshll.u32 [#allocation2], 4
      %s18 = int_to_ptr.vmem [resolvable:$true] %s17
      %23 = dma.hbm_to_vmem [thread:$0]  %s16, 1024, %s18, [#allocation3], 128, 128, 8
    $region9: #{tpu_custom_call.1} parent=1 // pred_fallthru
      _
    // Predicated region
    $region10: #{tpu_custom_call.1} parent=1 // pred_check
      _
    $region11: #{tpu_custom_call.1} parent=1 // pred_check_branch
      %25 = sbr.rel (0) target = $region13
    $region12: #{tpu_custom_call.1} parent=1 // pred_region
      %27 = dma.done [#allocation3], 1024
    $region13: #{tpu_custom_call.1} parent=1 // pred_fallthru
      _
    %v28 = vld [vmem:[#allocation2] sm:$0xff]
    %v29 = vld [vmem:[#allocation2 + $0x8] sm:$0xff]
    %v30 = vld [vmem:[#allocation2 + $0x10] sm:$0xff]
    %v31 = vld [vmem:[#allocation2 + $0x18] sm:$0xff]
    %v32 = vld [vmem:[#allocation2 + $0x20] sm:$0xff]
    %v33 = vld [vmem:[#allocation2 + $0x28] sm:$0xff]
    %v34 = vld [vmem:[#allocation2 + $0x30] sm:$0xff]
    %v35 = vld [vmem:[#allocation2 + $0x38] sm:$0xff]
    %v36 = vld [vmem:[%s0] sm:$0xf]
    %38 = vset.pattern.permute.xlu0 0
    %39 = vperm.xlu0 %38, %v36
    %v40 = vpop.permute.xlu0 %39
    %v42 = vunpack.c.l.s4 839922192
    %v43 = vunpack.c.0.s8 %v42
    %v44 = vperm.slane %v40, %v43
    %v46 = vmul.f32 %v28, %v44
    %v47 = vmul.f32 %v29, %v44
    %v48 = vmul.f32 %v30, %v44
    %v49 = vmul.f32 %v31, %v44
    %v50 = vmul.f32 %v32, %v44
    %v51 = vmul.f32 %v33, %v44
    %v52 = vmul.f32 %v34, %v44
    %v53 = vmul.f32 %v35, %v44
    %62 = vst [vmem:[#allocation1] ss:$2 sm:$0xff] %v46
    %v63 = vld.sshfl [vmem:[#allocation1] sm:$0xff pattern:$0x75316420]
    %v64 = vld.sshfl [vmem:[#allocation1 + $0x8] sm:$0xff pattern:$0x75316420]
    %s65 = scalar_lea.vmem [#allocation1], 16
    %66 = vst [vmem:[%s65] ss:$2 sm:$0xff] %v47
    %v67 = vld.sshfl [vmem:[#allocation1 + $0x10] sm:$0xff pattern:$0x75316420]
    %v68 = vld.sshfl [vmem:[#allocation1 + $0x18] sm:$0xff pattern:$0x75316420]
    %s69 = scalar_lea.vmem [#allocation1], 32
    %70 = vst [vmem:[%s69] ss:$2 sm:$0xff] %v48
    %v71 = vld.sshfl [vmem:[#allocation1 + $0x20] sm:$0xff pattern:$0x75316420]
    %v72 = vld.sshfl [vmem:[#allocation1 + $0x28] sm:$0xff pattern:$0x75316420]
    %s73 = scalar_lea.vmem [#allocation1], 48
    %74 = vst [vmem:[%s73] ss:$2 sm:$0xff] %v49
    %v75 = vld.sshfl [vmem:[#allocation1 + $0x30] sm:$0xff pattern:$0x75316420]
    %v76 = vld.sshfl [vmem:[#allocation1 + $0x38] sm:$0xff pattern:$0x75316420]
    %77 = vst [vmem:[#allocation1] ss:$2 sm:$0xff] %v50
    %v78 = vld.sshfl [vmem:[#allocation1] sm:$0xff pattern:$0x75316420]
    %v79 = vld.sshfl [vmem:[#allocation1 + $0x8] sm:$0xff pattern:$0x75316420]
    %80 = vst [vmem:[%s65] ss:$2 sm:$0xff] %v51
    %v81 = vld.sshfl [vmem:[#allocation1 + $0x10] sm:$0xff pattern:$0x75316420]
    %v82 = vld.sshfl [vmem:[#allocation1 + $0x18] sm:$0xff pattern:$0x75316420]
    %83 = vst [vmem:[%s69] ss:$2 sm:$0xff] %v52
    %v84 = vld.sshfl [vmem:[#allocation1 + $0x20] sm:$0xff pattern:$0x75316420]
    %v85 = vld.sshfl [vmem:[#allocation1 + $0x28] sm:$0xff pattern:$0x75316420]
    %86 = vst [vmem:[%s73] ss:$2 sm:$0xff] %v53
    %v87 = vld.sshfl [vmem:[#allocation1 + $0x30] sm:$0xff pattern:$0x75316420]
    %v88 = vld.sshfl [vmem:[#allocation1 + $0x38] sm:$0xff pattern:$0x75316420]
    %vm105 = vcmask 1043456
    %v106 = vsel %vm105, %v63, 0.0
    %v107 = vrot.slane %v106, 4
    %v108 = vadd.f32 %v106, %v107
    %v109 = vrot.slane %v108, 2
    %v110 = vadd.f32 %v108, %v109
    %v111 = vrot.slane %v110, 1
    %v112 = vadd.f32 %v110, %v111
    %v113 = vsel %vm105, %v64, 0.0
    %v114 = vrot.slane %v113, 4
    %v115 = vadd.f32 %v113, %v114
    %v116 = vrot.slane %v115, 2
    %v117 = vadd.f32 %v115, %v116
    %v118 = vrot.slane %v117, 1
    %v119 = vadd.f32 %v117, %v118
    %v120 = vsel %vm105, %v67, 0.0
    %v121 = vrot.slane %v120, 4
    %v122 = vadd.f32 %v120, %v121
    %v123 = vrot.slane %v122, 2
    %v124 = vadd.f32 %v122, %v123
    %v125 = vrot.slane %v124, 1
    %v126 = vadd.f32 %v124, %v125
    %v127 = vsel %vm105, %v68, 0.0
    %v128 = vrot.slane %v127, 4
    %v129 = vadd.f32 %v127, %v128
    %v130 = vrot.slane %v129, 2
    %v131 = vadd.f32 %v129, %v130
    %v132 = vrot.slane %v131, 1
    %v133 = vadd.f32 %v131, %v132
    %v134 = vsel %vm105, %v71, 0.0
    %v135 = vrot.slane %v134, 4
    %v136 = vadd.f32 %v134, %v135
    %v137 = vrot.slane %v136, 2
    %v138 = vadd.f32 %v136, %v137
    %v139 = vrot.slane %v138, 1
    %v140 = vadd.f32 %v138, %v139
    %v141 = vsel %vm105, %v72, 0.0
    %v142 = vrot.slane %v141, 4
    %v143 = vadd.f32 %v141, %v142
    %v144 = vrot.slane %v143, 2
    %v145 = vadd.f32 %v143, %v144
    %v146 = vrot.slane %v145, 1
    %v147 = vadd.f32 %v145, %v146
    %v148 = vsel %vm105, %v75, 0.0
    %v149 = vrot.slane %v148, 4
    %v150 = vadd.f32 %v148, %v149
    %v151 = vrot.slane %v150, 2
    %v152 = vadd.f32 %v150, %v151
    %v153 = vrot.slane %v152, 1
    %v154 = vadd.f32 %v152, %v153
    %v155 = vsel %vm105, %v76, 0.0
    %v156 = vrot.slane %v155, 4
    %v157 = vadd.f32 %v155, %v156
    %v158 = vrot.slane %v157, 2
    %v159 = vadd.f32 %v157, %v158
    %v160 = vrot.slane %v159, 1
    %v161 = vadd.f32 %v159, %v160
    %v162 = vsel %vm105, %v78, 0.0
    %v163 = vrot.slane %v162, 4
    %v164 = vadd.f32 %v162, %v163
    %v165 = vrot.slane %v164, 2
    %v166 = vadd.f32 %v164, %v165
    %v167 = vrot.slane %v166, 1
    %v168 = vadd.f32 %v166, %v167
    %v169 = vsel %vm105, %v79, 0.0
    %v170 = vrot.slane %v169, 4
    %v171 = vadd.f32 %v169, %v170
    %v172 = vrot.slane %v171, 2
    %v173 = vadd.f32 %v171, %v172
    %v174 = vrot.slane %v173, 1
    %v175 = vadd.f32 %v173, %v174
    %v176 = vsel %vm105, %v81, 0.0
    %v177 = vrot.slane %v176, 4
    %v178 = vadd.f32 %v176, %v177
    %v179 = vrot.slane %v178, 2
    %v180 = vadd.f32 %v178, %v179
    %v181 = vrot.slane %v180, 1
    %v182 = vadd.f32 %v180, %v181
    %v183 = vsel %vm105, %v82, 0.0
    %v184 = vrot.slane %v183, 4
    %v185 = vadd.f32 %v183, %v184
    %v186 = vrot.slane %v185, 2
    %v187 = vadd.f32 %v185, %v186
    %v188 = vrot.slane %v187, 1
    %v189 = vadd.f32 %v187, %v188
    %v190 = vsel %vm105, %v84, 0.0
    %v191 = vrot.slane %v190, 4
    %v192 = vadd.f32 %v190, %v191
    %v193 = vrot.slane %v192, 2
    %v194 = vadd.f32 %v192, %v193
    %v195 = vrot.slane %v194, 1
    %v196 = vadd.f32 %v194, %v195
    %v197 = vsel %vm105, %v85, 0.0
    %v198 = vrot.slane %v197, 4
    %v199 = vadd.f32 %v197, %v198
    %v200 = vrot.slane %v199, 2
    %v201 = vadd.f32 %v199, %v200
    %v202 = vrot.slane %v201, 1
    %v203 = vadd.f32 %v201, %v202
    %v204 = vsel %vm105, %v87, 0.0
    %v205 = vrot.slane %v204, 4
    %v206 = vadd.f32 %v204, %v205
    %v207 = vrot.slane %v206, 2
    %v208 = vadd.f32 %v206, %v207
    %v209 = vrot.slane %v208, 1
    %v210 = vadd.f32 %v208, %v209
    %v211 = vsel %vm105, %v88, 0.0
    %v212 = vrot.slane %v211, 4
    %v213 = vadd.f32 %v211, %v212
    %v214 = vrot.slane %v213, 2
    %v215 = vadd.f32 %v213, %v214
    %v216 = vrot.slane %v215, 1
    %v217 = vadd.f32 %v215, %v216
    %vm234 = vcmask 1041409
    %v235 = vsel %vm234, %v126, %v112
    %vm236 = vcmask 1042434
    %v237 = vsel %vm236, %v140, %v235
    %vm238 = vcmask 1043459
    %v239 = vsel %vm238, %v154, %v237
    %vm240 = vcmask 1044484
    %v241 = vsel %vm240, %v168, %v239
    %vm242 = vcmask 1045509
    %v243 = vsel %vm242, %v182, %v241
    %vm244 = vcmask 1046534
    %v245 = vsel %vm244, %v196, %v243
    %vm246 = vcmask 1047559
    %v247 = vsel %vm246, %v210, %v245
    %v248 = vsel %vm234, %v133, %v119
    %v249 = vsel %vm236, %v147, %v248
    %v250 = vsel %vm238, %v161, %v249
    %v251 = vsel %vm240, %v175, %v250
    %v252 = vsel %vm242, %v189, %v251
    %v253 = vsel %vm244, %v203, %v252
    %v254 = vsel %vm246, %v217, %v253
    %257 = vst [vmem:[#allocation5] sm:$0xff] %v247
    %258 = vst [vmem:[#allocation5 + $0x8] sm:$0xff] %v254
    // Predicated region
    $region14: #{tpu_custom_call.1} parent=1 // pred_check
      _
    $region15: #{tpu_custom_call.1} parent=1 // pred_check_branch
      %260 = sbr.rel (0) target = $region17
    $region16: #{tpu_custom_call.1} parent=1 // pred_region
      %262 = vsyncadd [#allocation4], 0
      %s264 = sshll.u32 [#allocation5], 4
      %s265 = int_to_ptr.vmem [resolvable:$true] %s264
      %s266 = sshll.u32 %s2, 4
      %s267 = int_to_ptr.hbm [resolvable:$true] %s266
      %269 = dma.vmem_to_hbm [thread:$0]  %s265, 256, %s267, [#allocation4]
    $region17: #{tpu_custom_call.1} parent=1 // pred_fallthru
      _
    // Predicated region
    $region18: #{tpu_custom_call.1} parent=1 // pred_check
      _
    $region19: #{tpu_custom_call.1} parent=1 // pred_check_branch
      %271 = sbr.rel (0) target = $region21
    $region20: #{tpu_custom_call.1} parent=1 // pred_region
      %273 = dma.done [#allocation4], 256
    $region21: #{tpu_custom_call.1} parent=1 // pred_fallthru
      _
    %274 = vsyncpa [#allocation3], 1
    %275 = vsyncpa [#allocation4], 1

</llo_original>
